<compile_context>
chip_gen: v7x
topology: tpu7x:2x2x1
jax: 0.10.0
libtpu: 0.0.40
codegen_flags: <defaults>
</compile_context>

<pallas_src>
import functools
import math

import jax
import jax.numpy as jnp
from jax.experimental import pallas as pl
from jax.experimental.pallas import tpu as pltpu


def _round_up(x, m):
    return (x + m - 1) // m * m


# ----------------------------- Pallas kernel ------------------------------ #
def _lstm_chunk_kernel(gx_ref, whh_ref, out_ref, h_scr, c_scr, *, dhp, chunk_t):
    """One T-chunk of the fused (multi-direction) LSTM recurrence.

    gx_ref : (chunk_t, Bp, 4*dhp) bf16  precomputed x@W_ih + bias, gate-grouped
                                        columns; each gate block padded to dhp.
    whh_ref: (dhp, 4*dhp)         bf16  block-diagonal recurrent weights.
    out_ref: (chunk_t, Bp, dhp)   f32   per-step hidden state (loop order).
    h_scr, c_scr: (Bp, dhp)       f32   state persisted across grid chunks.
    """
    chunk = pl.program_id(0)

    @pl.when(chunk == 0)
    def _():
        h_scr[...] = jnp.zeros_like(h_scr)   # h0 = c0 = 0 (matches Encoder)
        c_scr[...] = jnp.zeros_like(c_scr)

    whh = whh_ref[...]                       # hoist recurrent RHS out of loop

    def step(s, carry):
        h, c = carry                         # state stays in vregs
        gates = gx_ref[s].astype(jnp.float32) + jnp.dot(
            h.astype(jnp.bfloat16), whh, preferred_element_type=jnp.float32)
        # 128-lane-aligned gate slices (dhp is a multiple of 128).
        i_g = jax.nn.sigmoid(gates[:, 0 * dhp:1 * dhp])
        f_g = jax.nn.sigmoid(gates[:, 1 * dhp:2 * dhp])
        g_g = jnp.tanh(gates[:, 2 * dhp:3 * dhp])
        o_g = jax.nn.sigmoid(gates[:, 3 * dhp:4 * dhp])
        c_new = f_g * c + i_g * g_g
        h_new = o_g * jnp.tanh(c_new)
        out_ref[s] = h_new.astype(out_ref.dtype)   # full-width, unmasked store
        return (h_new, c_new)

    h_fin, c_fin = jax.lax.fori_loop(
        0, chunk_t, step, (h_scr[...], c_scr[...]),
        unroll=min(4, chunk_t))
    h_scr[...] = h_fin                       # persist state into next chunk
    c_scr[...] = c_fin


# ------------------------- layer wrapper (per layer) ----------------------- #
def lstm_layer_fused(x, dir_params, chunk_t=None):
    """Run one LSTM layer (all directions fused) in a single pallas_call.

    x          : (T, B, I) float32, time-major.
    dir_params : list over directions of (w_ih (4H,I), w_hh (4H,H),
                                          b_ih (4H,), b_hh (4H,)) PyTorch layout.
    Returns:
      seq    : (T, B, D*H) layer output in ORIGINAL time order
      finals : list of (B, H) final hidden per direction ([fwd, bwd])
    """
    T, B, _ = x.shape
    D = len(dir_params)
    H = dir_params[0][1].shape[1]
    DH = D * H
    DHp = max(_round_up(DH, 128), 128)      # lane-padded state width
    Bp = max(_round_up(B, 8), 8)            # sublane-padded batch

    if chunk_t is None:
        chunk_t = min(T, 32)
    if T % chunk_t:                          # keep it simple for odd T
        chunk_t = T
    num_chunks = T // chunk_t

    xf = x.astype(jnp.float32)
    if Bp != B:
        xf = jnp.pad(xf, ((0, 0), (0, Bp - B), (0, 0)))
    x_bf = xf.astype(jnp.bfloat16)

    # ---- Input projection for all timesteps: one batched matmul per dir ----
    # Column layout: col = gate_k * DHp + (dir_d * H + j); padded cols are 0.
    gx = jnp.zeros((T, Bp, 4, DHp), jnp.float32)
    for d, (w_ih, _, b_ih, b_hh) in enumerate(dir_params):
        x_d = x_bf if d == 0 else x_bf[::-1]         # bwd consumes reversed time
        g = jnp.einsum('tbi,gi->tbg', x_d, w_ih.astype(jnp.bfloat16),
                       preferred_element_type=jnp.float32)
        g = g + (b_ih + b_hh).astype(jnp.float32)    # bias folded in
        gx = gx.at[:, :, :, d * H:(d + 1) * H].set(g.reshape(T, Bp, 4, H))
    gx = gx.reshape(T, Bp, 4 * DHp).astype(jnp.bfloat16)

    # ---- Block-diagonal recurrent weight: (DHp, 4*DHp), same column layout ----
    whh_pad = jnp.zeros((DHp, 4, DHp), jnp.float32)
    for d, (_, w_hh, _, _) in enumerate(dir_params):
        wt = w_hh.astype(jnp.float32).T.reshape(H, 4, H)   # [m, gate, j]
        whh_pad = whh_pad.at[d * H:(d + 1) * H, :, d * H:(d + 1) * H].set(wt)
    whh_blk = whh_pad.reshape(DHp, 4 * DHp).astype(jnp.bfloat16)

    out = pl.pallas_call(
        functools.partial(_lstm_chunk_kernel, dhp=DHp, chunk_t=chunk_t),
        out_shape=jax.ShapeDtypeStruct((T, Bp, DHp), jnp.float32),
        grid_spec=pltpu.PrefetchScalarGridSpec(
            num_scalar_prefetch=0,
            grid=(num_chunks,),
            in_specs=[
                pl.BlockSpec((chunk_t, Bp, 4 * DHp), lambda c: (c, 0, 0)),
                pl.BlockSpec((DHp, 4 * DHp), lambda c: (0, 0)),
            ],
            out_specs=pl.BlockSpec((chunk_t, Bp, DHp), lambda c: (c, 0, 0)),
            scratch_shapes=[
                pltpu.VMEM((Bp, DHp), jnp.float32),   # h carried across chunks
                pltpu.VMEM((Bp, DHp), jnp.float32),   # c carried across chunks
            ]),
        compiler_params=pltpu.CompilerParams(
            dimension_semantics=("arbitrary",),        # sequential chunk axis
            vmem_limit_bytes=32 * 1024 * 1024),
    )(gx, whh_blk)

    out = out[:, :B, :]                               # drop batch padding
    # Loop order: fwd dir at step s <-> time s; bwd dir at step s <-> time T-1-s.
    finals = [out[T - 1, :, d * H:(d + 1) * H] for d in range(D)]
    if D == 1:
        seq = out[:, :, :H]
    else:
        fwd = out[:, :, 0:H]
        bwd = out[::-1, :, H:2 * H]                   # back to original time order
        seq = jnp.concatenate([fwd, bwd], axis=-1)
    return seq, finals


# --------------------------- Encoder (module) ------------------------------ #
def encoder_forward(inputs, params, config, chunk_t=None):
    """Replicates Encoder.forward (eval mode).

    inputs: (T, B, input_size) time-major.
    Returns ht[-1]                  -> (B, H)   if not birnn
            concat(fwd, bwd) finals -> (B, 2H)  if birnn
    """
    num_dirs = 2 if config["birnn"] else 1
    layer_input = inputs
    finals = None
    for layer in range(config["n_layers"]):
        dir_params = [params[(layer, d)] for d in range(num_dirs)]
        layer_input, finals = lstm_layer_fused(layer_input, dir_params, chunk_t)
    if num_dirs == 1:
        return finals[0]
    # ht[-2:].transpose(0,1).contiguous().view(B, -1) == concat(fwd, bwd) per row
    return jnp.concatenate([finals[0], finals[1]], axis=-1)


# ------------------------- pure-JAX reference ------------------------------ #
def _lstm_ref_single(x, w_ih, w_hh, bias):
    H = w_hh.shape[1]
    B = x.shape[1]

    def step(carry, x_t):
        h, c = carry
        gates = x_t @ w_ih.T + h @ w_hh.T + bias
        i_g = jax.nn.sigmoid(gates[:, 0 * H:1 * H])
        f_g = jax.nn.sigmoid(gates[:, 1 * H:2 * H])
        g_g = jnp.tanh(gates[:, 2 * H:3 * H])
        o_g = jax.nn.sigmoid(gates[:, 3 * H:4 * H])
        c = f_g * c + i_g * g_g
        h = o_g * jnp.tanh(c)
        return (h, c), h

    h0 = jnp.zeros((B, H), jnp.float32)
    (_, _), hs = jax.lax.scan(step, (h0, h0), x)
    return hs


def encoder_ref(inputs, params, config):
    num_dirs = 2 if config["birnn"] else 1
    layer_input = inputs
    last_layer_h = None
    for layer in range(config["n_layers"]):
        dir_outputs, layer_h = [], []
        for d in range(num_dirs):
            w_ih, w_hh, b_ih, b_hh = params[(layer, d)]
            x_dir = layer_input if d == 0 else jnp.flip(layer_input, axis=0)
            out = _lstm_ref_single(x_dir, w_ih, w_hh, b_ih + b_hh)
            layer_h.append(out[-1])
            if d == 1:
                out = jnp.flip(out, axis=0)
            dir_outputs.append(out)
        layer_input = (jnp.concatenate(dir_outputs, axis=-1)
                       if num_dirs == 2 else dir_outputs[0])
        last_layer_h = layer_h
    if not config["birnn"]:
        return last_layer_h[0]
    return jnp.concatenate([last_layer_h[0], last_layer_h[1]], axis=-1)


# --------------------------------- main ------------------------------------ #
if __name__ == "__main__":
    config = dict(
        d_embed=32,
        d_proj=32,
        projection=False,     # -> input_size = d_embed
        d_hidden=32,
        n_layers=2,
        birnn=True,           # -> n_cells = n_layers * 2
        rnn_dropout=0.0,
    )
    T, B = 8, 2
    input_size = config["d_proj"] if config["projection"] else config["d_embed"]
    H = config["d_hidden"]
    num_dirs = 2 if config["birnn"] else 1

    key = jax.random.PRNGKey(0)
    key, k_in = jax.random.split(key)
    inputs = jax.random.normal(k_in, (T, B, input_size), dtype=jnp.float32)

    # Deterministic PyTorch-style LSTM parameter init: U(-1/sqrt(H), 1/sqrt(H))
    k_scale = 1.0 / math.sqrt(H)
    params = {}
    for layer in range(config["n_layers"]):
        in_sz = input_size if layer == 0 else H * num_dirs
        for d in range(num_dirs):
            key, k1, k2, k3, k4 = jax.random.split(key, 5)
            params[(layer, d)] = (
                jax.random.uniform(k1, (4 * H, in_sz), jnp.float32, -k_scale, k_scale),
                jax.random.uniform(k2, (4 * H, H), jnp.float32, -k_scale, k_scale),
                jax.random.uniform(k3, (4 * H,), jnp.float32, -k_scale, k_scale),
                jax.random.uniform(k4, (4 * H,), jnp.float32, -k_scale, k_scale),
            )

    # bf16 matmul operands => looser tolerance vs the pure-f32 reference.
    TOL = 3e-2

    # Bidirectional, 2-layer path; chunk_t=4 exercises the multi-chunk grid
    # (state carried across grid steps through VMEM scratch).
    out = jax.block_until_ready(encoder_forward(inputs, params, config, chunk_t=4))
    ref = jax.block_until_ready(encoder_ref(inputs, params, config))
    expected_width = H * num_dirs
    assert out.shape == (B, expected_width), out.shape
    assert jnp.allclose(out, ref, atol=TOL, rtol=TOL), (
        float(jnp.max(jnp.abs(out - ref))))

    # Unidirectional, single-layer path (D == 1), single-chunk grid.
    config_uni = dict(config, birnn=False, n_layers=1)
    params_uni = {(0, 0): params[(0, 0)]}
    out_u = jax.block_until_ready(encoder_forward(inputs, params_uni, config_uni))
    ref_u = jax.block_until_ready(encoder_ref(inputs, params_uni, config_uni))
    assert out_u.shape == (B, H), out_u.shape
    assert jnp.allclose(out_u, ref_u, atol=TOL, rtol=TOL), (
        float(jnp.max(jnp.abs(out_u - ref_u))))

    print("KERNEL_OK")
</pallas_src>

<mosaic_0001>
module attributes {stable_mosaic.version = 11 : i64} {
  func.func @_lstm_chunk_kernel(%arg0: i32, %arg1: memref<4x8x512xbf16, #tpu.memory_space<vmem>>, %arg2: memref<128x512xbf16, #tpu.memory_space<vmem>>, %arg3: memref<4x8x128xf32, #tpu.memory_space<vmem>>, %arg4: memref<8x128xf32, #tpu.memory_space<vmem>>, %arg5: memref<8x128xf32, #tpu.memory_space<vmem>>) attributes {dimension_semantics = [#tpu.dimension_semantics<arbitrary>], iteration_bounds = array<i64: 2>, scalar_prefetch = 0 : i64, scratch_operands = 2 : i64, tpu.core_type = #tpu.core_type<tc>, window_params = [{transform_indices = @transform_0, window_bounds = array<i64: 4, 8, 512>}, {pipeline_mode = #tpu.pipeline_mode<synchronous>, transform_indices = @transform_1, window_bounds = array<i64: 128, 512>}, {transform_indices = @transform_2, window_bounds = array<i64: 4, 8, 128>}]} {
    %c0_i32 = arith.constant 0 : i32
    %0 = arith.cmpi eq, %arg0, %c0_i32 : i32
    %1 = arith.extui %0 : i1 to i32
    %c0_i32_0 = arith.constant 0 : i32
    %2 = arith.cmpi ne, %1, %c0_i32_0 : i32
    scf.if %2 {
      %cst_42 = arith.constant 0.000000e+00 : f32
      %152 = vector.broadcast %cst_42 : f32 to vector<8x128xf32>
      %c0_43 = arith.constant 0 : index
      %c0_44 = arith.constant 0 : index
      %153 = vector.load %arg4[%c0_43, %c0_44] : memref<8x128xf32, #tpu.memory_space<vmem>>, vector<8x128xf32>
      tpu.vector_store %arg4[%c0_43, %c0_44], %152 {strides = array<i32>} : memref<8x128xf32, #tpu.memory_space<vmem>>, vector<8x128xf32>,
      %cst_45 = arith.constant 0.000000e+00 : f32
      %154 = vector.broadcast %cst_45 : f32 to vector<8x128xf32>
      %c0_46 = arith.constant 0 : index
      %c0_47 = arith.constant 0 : index
      %155 = vector.load %arg5[%c0_46, %c0_47] : memref<8x128xf32, #tpu.memory_space<vmem>>, vector<8x128xf32>
      tpu.vector_store %arg5[%c0_46, %c0_47], %154 {strides = array<i32>} : memref<8x128xf32, #tpu.memory_space<vmem>>, vector<8x128xf32>,
    } else {
    }
    %c0 = arith.constant 0 : index
    %c0_1 = arith.constant 0 : index
    %3 = vector.load %arg2[%c0, %c0_1] : memref<128x512xbf16, #tpu.memory_space<vmem>>, vector<128x512xbf16>
    %c0_2 = arith.constant 0 : index
    %c0_3 = arith.constant 0 : index
    %4 = vector.load %arg4[%c0_2, %c0_3] : memref<8x128xf32, #tpu.memory_space<vmem>>, vector<8x128xf32>
    %c0_4 = arith.constant 0 : index
    %c0_5 = arith.constant 0 : index
    %5 = vector.load %arg5[%c0_4, %c0_5] : memref<8x128xf32, #tpu.memory_space<vmem>>, vector<8x128xf32>
    %c0_i32_6 = arith.constant 0 : i32
    %6 = arith.index_cast %c0_i32_6 : i32 to index
    %c0_7 = arith.constant 0 : index
    %c0_8 = arith.constant 0 : index
    %7 = vector.load %arg1[%6, %c0_7, %c0_8] : memref<4x8x512xbf16, #tpu.memory_space<vmem>>, vector<1x8x512xbf16>
    %8 = vector.shape_cast %7 : vector<1x8x512xbf16> to vector<8x512xbf16>
    %9 = arith.extf %8 : vector<8x512xbf16> to vector<8x512xf32>
    %10 = arith.truncf %4 : vector<8x128xf32> to vector<8x128xbf16>
    %cst = arith.constant dense<0.000000e+00> : vector<8x512xf32>
    %11 = tpu.matmul %10, %3, %cst {dimension_numbers = #tpu.dot_dimension_numbers<[1], [0], [0], [1], [0, 0, 1, 1], [], []>} : vector<8x128xbf16>, vector<128x512xbf16>, vector<8x512xf32> -> vector<8x512xf32>
    %12 = arith.addf %9, %11 : vector<8x512xf32>
    %13 = vector.extract_strided_slice %12 {offsets = [0, 0], sizes = [8, 128], strides = [1, 1]} : vector<8x512xf32> to vector<8x128xf32>
    %14 = arith.negf %13 : vector<8x128xf32>
    %15 = math.exp %14 : vector<8x128xf32>
    %cst_9 = arith.constant 1.000000e+00 : f32
    %16 = vector.broadcast %cst_9 : f32 to vector<8x128xf32>
    %17 = arith.addf %16, %15 : vector<8x128xf32>
    %18 = arith.divf %16, %17 : vector<8x128xf32>
    %19 = vector.extract_strided_slice %12 {offsets = [0, 128], sizes = [8, 128], strides = [1, 1]} : vector<8x512xf32> to vector<8x128xf32>
    %20 = arith.negf %19 : vector<8x128xf32>
    %21 = math.exp %20 : vector<8x128xf32>
    %cst_10 = arith.constant 1.000000e+00 : f32
    %22 = vector.broadcast %cst_10 : f32 to vector<8x128xf32>
    %23 = arith.addf %22, %21 : vector<8x128xf32>
    %24 = arith.divf %22, %23 : vector<8x128xf32>
    %25 = vector.extract_strided_slice %12 {offsets = [0, 256], sizes = [8, 128], strides = [1, 1]} : vector<8x512xf32> to vector<8x128xf32>
    %26 = math.tanh %25 : vector<8x128xf32>
    %27 = vector.extract_strided_slice %12 {offsets = [0, 384], sizes = [8, 128], strides = [1, 1]} : vector<8x512xf32> to vector<8x128xf32>
    %28 = arith.negf %27 : vector<8x128xf32>
    %29 = math.exp %28 : vector<8x128xf32>
    %cst_11 = arith.constant 1.000000e+00 : f32
    %30 = vector.broadcast %cst_11 : f32 to vector<8x128xf32>
    %31 = arith.addf %30, %29 : vector<8x128xf32>
    %32 = arith.divf %30, %31 : vector<8x128xf32>
    %33 = arith.mulf %24, %5 : vector<8x128xf32>
    %34 = arith.mulf %18, %26 : vector<8x128xf32>
    %35 = arith.addf %33, %34 : vector<8x128xf32>
    %36 = math.tanh %35 : vector<8x128xf32>
    %37 = arith.mulf %32, %36 : vector<8x128xf32>
    %38 = arith.index_cast %c0_i32_6 : i32 to index
    %c0_12 = arith.constant 0 : index
    %c0_13 = arith.constant 0 : index
    %39 = vector.load %arg3[%38, %c0_12, %c0_13] : memref<4x8x128xf32, #tpu.memory_space<vmem>>, vector<1x8x128xf32>
    %40 = vector.shape_cast %39 : vector<1x8x128xf32> to vector<8x128xf32>
    %41 = vector.shape_cast %37 : vector<8x128xf32> to vector<1x8x128xf32>
    tpu.vector_store %arg3[%38, %c0_12, %c0_13], %41 {strides = array<i32>} : memref<4x8x128xf32, #tpu.memory_space<vmem>>, vector<1x8x128xf32>,
    %c1_i32 = arith.constant 1 : i32
    %42 = arith.index_cast %c1_i32 : i32 to index
    %c0_14 = arith.constant 0 : index
    %c0_15 = arith.constant 0 : index
    %43 = vector.load %arg1[%42, %c0_14, %c0_15] : memref<4x8x512xbf16, #tpu.memory_space<vmem>>, vector<1x8x512xbf16>
    %44 = vector.shape_cast %43 : vector<1x8x512xbf16> to vector<8x512xbf16>
    %45 = arith.extf %44 : vector<8x512xbf16> to vector<8x512xf32>
    %46 = arith.truncf %37 : vector<8x128xf32> to vector<8x128xbf16>
    %cst_16 = arith.constant dense<0.000000e+00> : vector<8x512xf32>
    %47 = tpu.matmul %46, %3, %cst_16 {dimension_numbers = #tpu.dot_dimension_numbers<[1], [0], [0], [1], [0, 0, 1, 1], [], []>} : vector<8x128xbf16>, vector<128x512xbf16>, vector<8x512xf32> -> vector<8x512xf32>
    %48 = arith.addf %45, %47 : vector<8x512xf32>
    %49 = vector.extract_strided_slice %48 {offsets = [0, 0], sizes = [8, 128], strides = [1, 1]} : vector<8x512xf32> to vector<8x128xf32>
    %50 = arith.negf %49 : vector<8x128xf32>
    %51 = math.exp %50 : vector<8x128xf32>
    %cst_17 = arith.constant 1.000000e+00 : f32
    %52 = vector.broadcast %cst_17 : f32 to vector<8x128xf32>
    %53 = arith.addf %52, %51 : vector<8x128xf32>
    %54 = arith.divf %52, %53 : vector<8x128xf32>
    %55 = vector.extract_strided_slice %48 {offsets = [0, 128], sizes = [8, 128], strides = [1, 1]} : vector<8x512xf32> to vector<8x128xf32>
    %56 = arith.negf %55 : vector<8x128xf32>
    %57 = math.exp %56 : vector<8x128xf32>
    %cst_18 = arith.constant 1.000000e+00 : f32
    %58 = vector.broadcast %cst_18 : f32 to vector<8x128xf32>
    %59 = arith.addf %58, %57 : vector<8x128xf32>
    %60 = arith.divf %58, %59 : vector<8x128xf32>
    %61 = vector.extract_strided_slice %48 {offsets = [0, 256], sizes = [8, 128], strides = [1, 1]} : vector<8x512xf32> to vector<8x128xf32>
    %62 = math.tanh %61 : vector<8x128xf32>
    %63 = vector.extract_strided_slice %48 {offsets = [0, 384], sizes = [8, 128], strides = [1, 1]} : vector<8x512xf32> to vector<8x128xf32>
    %64 = arith.negf %63 : vector<8x128xf32>
    %65 = math.exp %64 : vector<8x128xf32>
    %cst_19 = arith.constant 1.000000e+00 : f32
    %66 = vector.broadcast %cst_19 : f32 to vector<8x128xf32>
    %67 = arith.addf %66, %65 : vector<8x128xf32>
    %68 = arith.divf %66, %67 : vector<8x128xf32>
    %69 = arith.mulf %60, %35 : vector<8x128xf32>
    %70 = arith.mulf %54, %62 : vector<8x128xf32>
    %71 = arith.addf %69, %70 : vector<8x128xf32>
    %72 = math.tanh %71 : vector<8x128xf32>
    %73 = arith.mulf %68, %72 : vector<8x128xf32>
    %74 = arith.index_cast %c1_i32 : i32 to index
    %c0_20 = arith.constant 0 : index
    %c0_21 = arith.constant 0 : index
    %75 = vector.load %arg3[%74, %c0_20, %c0_21] : memref<4x8x128xf32, #tpu.memory_space<vmem>>, vector<1x8x128xf32>
    %76 = vector.shape_cast %75 : vector<1x8x128xf32> to vector<8x128xf32>
    %77 = vector.shape_cast %73 : vector<8x128xf32> to vector<1x8x128xf32>
    tpu.vector_store %arg3[%74, %c0_20, %c0_21], %77 {strides = array<i32>} : memref<4x8x128xf32, #tpu.memory_space<vmem>>, vector<1x8x128xf32>,
    %c2_i32 = arith.constant 2 : i32
    %78 = arith.index_cast %c2_i32 : i32 to index
    %c0_22 = arith.constant 0 : index
    %c0_23 = arith.constant 0 : index
    %79 = vector.load %arg1[%78, %c0_22, %c0_23] : memref<4x8x512xbf16, #tpu.memory_space<vmem>>, vector<1x8x512xbf16>
    %80 = vector.shape_cast %79 : vector<1x8x512xbf16> to vector<8x512xbf16>
    %81 = arith.extf %80 : vector<8x512xbf16> to vector<8x512xf32>
    %82 = arith.truncf %73 : vector<8x128xf32> to vector<8x128xbf16>
    %cst_24 = arith.constant dense<0.000000e+00> : vector<8x512xf32>
    %83 = tpu.matmul %82, %3, %cst_24 {dimension_numbers = #tpu.dot_dimension_numbers<[1], [0], [0], [1], [0, 0, 1, 1], [], []>} : vector<8x128xbf16>, vector<128x512xbf16>, vector<8x512xf32> -> vector<8x512xf32>
    %84 = arith.addf %81, %83 : vector<8x512xf32>
    %85 = vector.extract_strided_slice %84 {offsets = [0, 0], sizes = [8, 128], strides = [1, 1]} : vector<8x512xf32> to vector<8x128xf32>
    %86 = arith.negf %85 : vector<8x128xf32>
    %87 = math.exp %86 : vector<8x128xf32>
    %cst_25 = arith.constant 1.000000e+00 : f32
    %88 = vector.broadcast %cst_25 : f32 to vector<8x128xf32>
    %89 = arith.addf %88, %87 : vector<8x128xf32>
    %90 = arith.divf %88, %89 : vector<8x128xf32>
    %91 = vector.extract_strided_slice %84 {offsets = [0, 128], sizes = [8, 128], strides = [1, 1]} : vector<8x512xf32> to vector<8x128xf32>
    %92 = arith.negf %91 : vector<8x128xf32>
    %93 = math.exp %92 : vector<8x128xf32>
    %cst_26 = arith.constant 1.000000e+00 : f32
    %94 = vector.broadcast %cst_26 : f32 to vector<8x128xf32>
    %95 = arith.addf %94, %93 : vector<8x128xf32>
    %96 = arith.divf %94, %95 : vector<8x128xf32>
    %97 = vector.extract_strided_slice %84 {offsets = [0, 256], sizes = [8, 128], strides = [1, 1]} : vector<8x512xf32> to vector<8x128xf32>
    %98 = math.tanh %97 : vector<8x128xf32>
    %99 = vector.extract_strided_slice %84 {offsets = [0, 384], sizes = [8, 128], strides = [1, 1]} : vector<8x512xf32> to vector<8x128xf32>
    %100 = arith.negf %99 : vector<8x128xf32>
    %101 = math.exp %100 : vector<8x128xf32>
    %cst_27 = arith.constant 1.000000e+00 : f32
    %102 = vector.broadcast %cst_27 : f32 to vector<8x128xf32>
    %103 = arith.addf %102, %101 : vector<8x128xf32>
    %104 = arith.divf %102, %103 : vector<8x128xf32>
    %105 = arith.mulf %96, %71 : vector<8x128xf32>
    %106 = arith.mulf %90, %98 : vector<8x128xf32>
    %107 = arith.addf %105, %106 : vector<8x128xf32>
    %108 = math.tanh %107 : vector<8x128xf32>
    %109 = arith.mulf %104, %108 : vector<8x128xf32>
    %110 = arith.index_cast %c2_i32 : i32 to index
    %c0_28 = arith.constant 0 : index
    %c0_29 = arith.constant 0 : index
    %111 = vector.load %arg3[%110, %c0_28, %c0_29] : memref<4x8x128xf32, #tpu.memory_space<vmem>>, vector<1x8x128xf32>
    %112 = vector.shape_cast %111 : vector<1x8x128xf32> to vector<8x128xf32>
    %113 = vector.shape_cast %109 : vector<8x128xf32> to vector<1x8x128xf32>
    tpu.vector_store %arg3[%110, %c0_28, %c0_29], %113 {strides = array<i32>} : memref<4x8x128xf32, #tpu.memory_space<vmem>>, vector<1x8x128xf32>,
    %c3_i32 = arith.constant 3 : i32
    %114 = arith.index_cast %c3_i32 : i32 to index
    %c0_30 = arith.constant 0 : index
    %c0_31 = arith.constant 0 : index
    %115 = vector.load %arg1[%114, %c0_30, %c0_31] : memref<4x8x512xbf16, #tpu.memory_space<vmem>>, vector<1x8x512xbf16>
    %116 = vector.shape_cast %115 : vector<1x8x512xbf16> to vector<8x512xbf16>
    %117 = arith.extf %116 : vector<8x512xbf16> to vector<8x512xf32>
    %118 = arith.truncf %109 : vector<8x128xf32> to vector<8x128xbf16>
    %cst_32 = arith.constant dense<0.000000e+00> : vector<8x512xf32>
    %119 = tpu.matmul %118, %3, %cst_32 {dimension_numbers = #tpu.dot_dimension_numbers<[1], [0], [0], [1], [0, 0, 1, 1], [], []>} : vector<8x128xbf16>, vector<128x512xbf16>, vector<8x512xf32> -> vector<8x512xf32>
    %120 = arith.addf %117, %119 : vector<8x512xf32>
    %121 = vector.extract_strided_slice %120 {offsets = [0, 0], sizes = [8, 128], strides = [1, 1]} : vector<8x512xf32> to vector<8x128xf32>
    %122 = arith.negf %121 : vector<8x128xf32>
    %123 = math.exp %122 : vector<8x128xf32>
    %cst_33 = arith.constant 1.000000e+00 : f32
    %124 = vector.broadcast %cst_33 : f32 to vector<8x128xf32>
    %125 = arith.addf %124, %123 : vector<8x128xf32>
    %126 = arith.divf %124, %125 : vector<8x128xf32>
    %127 = vector.extract_strided_slice %120 {offsets = [0, 128], sizes = [8, 128], strides = [1, 1]} : vector<8x512xf32> to vector<8x128xf32>
    %128 = arith.negf %127 : vector<8x128xf32>
    %129 = math.exp %128 : vector<8x128xf32>
    %cst_34 = arith.constant 1.000000e+00 : f32
    %130 = vector.broadcast %cst_34 : f32 to vector<8x128xf32>
    %131 = arith.addf %130, %129 : vector<8x128xf32>
    %132 = arith.divf %130, %131 : vector<8x128xf32>
    %133 = vector.extract_strided_slice %120 {offsets = [0, 256], sizes = [8, 128], strides = [1, 1]} : vector<8x512xf32> to vector<8x128xf32>
    %134 = math.tanh %133 : vector<8x128xf32>
    %135 = vector.extract_strided_slice %120 {offsets = [0, 384], sizes = [8, 128], strides = [1, 1]} : vector<8x512xf32> to vector<8x128xf32>
    %136 = arith.negf %135 : vector<8x128xf32>
    %137 = math.exp %136 : vector<8x128xf32>
    %cst_35 = arith.constant 1.000000e+00 : f32
    %138 = vector.broadcast %cst_35 : f32 to vector<8x128xf32>
    %139 = arith.addf %138, %137 : vector<8x128xf32>
    %140 = arith.divf %138, %139 : vector<8x128xf32>
    %141 = arith.mulf %132, %107 : vector<8x128xf32>
    %142 = arith.mulf %126, %134 : vector<8x128xf32>
    %143 = arith.addf %141, %142 : vector<8x128xf32>
    %144 = math.tanh %143 : vector<8x128xf32>
    %145 = arith.mulf %140, %144 : vector<8x128xf32>
    %146 = arith.index_cast %c3_i32 : i32 to index
    %c0_36 = arith.constant 0 : index
    %c0_37 = arith.constant 0 : index
    %147 = vector.load %arg3[%146, %c0_36, %c0_37] : memref<4x8x128xf32, #tpu.memory_space<vmem>>, vector<1x8x128xf32>
    %148 = vector.shape_cast %147 : vector<1x8x128xf32> to vector<8x128xf32>
    %149 = vector.shape_cast %145 : vector<8x128xf32> to vector<1x8x128xf32>
    tpu.vector_store %arg3[%146, %c0_36, %c0_37], %149 {strides = array<i32>} : memref<4x8x128xf32, #tpu.memory_space<vmem>>, vector<1x8x128xf32>,
    %c4_i32 = arith.constant 4 : i32
    %c0_38 = arith.constant 0 : index
    %c0_39 = arith.constant 0 : index
    %150 = vector.load %arg4[%c0_38, %c0_39] : memref<8x128xf32, #tpu.memory_space<vmem>>, vector<8x128xf32>
    tpu.vector_store %arg4[%c0_38, %c0_39], %145 {strides = array<i32>} : memref<8x128xf32, #tpu.memory_space<vmem>>, vector<8x128xf32>,
    %c0_40 = arith.constant 0 : index
    %c0_41 = arith.constant 0 : index
    %151 = vector.load %arg5[%c0_40, %c0_41] : memref<8x128xf32, #tpu.memory_space<vmem>>, vector<8x128xf32>
    tpu.vector_store %arg5[%c0_40, %c0_41], %143 {strides = array<i32>} : memref<8x128xf32, #tpu.memory_space<vmem>>, vector<8x128xf32>,
    return
  }
  func.func @transform_0(%arg0: i32) -> (i32, i32, i32) {
    %c0_i32 = arith.constant 0 : i32
    %c0_i32_0 = arith.constant 0 : i32
    %c0_i32_1 = arith.constant 0 : i32
    return %arg0, %c0_i32, %c0_i32_0 : i32, i32, i32
  }
  func.func @transform_1(%arg0: i32) -> (i32, i32) {
    %c0_i32 = arith.constant 0 : i32
    %c0_i32_0 = arith.constant 0 : i32
    %c0_i32_1 = arith.constant 0 : i32
    return %c0_i32, %c0_i32_0 : i32, i32
  }
  func.func @transform_2(%arg0: i32) -> (i32, i32, i32) {
    %c0_i32 = arith.constant 0 : i32
    %c0_i32_0 = arith.constant 0 : i32
    %c0_i32_1 = arith.constant 0 : i32
    return %arg0, %c0_i32, %c0_i32_0 : i32, i32, i32
  }
}

</mosaic_0001>

<llo_original>
// kernel: tpu_custom_call.1
$region0: #{tpu_custom_call.1}
  #allocation0 [shape = 'u32[]', space=smem, size = 0x4, offset = 0x4, fixed_abs, tag = 'smem constant byte address 0x4 - core index']
  #allocation1 [shape = 'u32[144,128]{1,0:T(1,128)}', space=vmem, size = 0x12000, scoped, tag = 'internal scratch']
  #allocation2 [shape = 'f32[8,128]{1,0:T(8,128)}', space=vmem, size = 0x1000, scoped, tag = 'scratch operand']
  #allocation3 [shape = 'f32[8,128]{1,0:T(8,128)}', space=vmem, size = 0x1000, scoped, tag = 'scratch operand']
  %s0 = inlined_call_operand.hbm [shape: bf16[8,8,512], index: 0, kind: input, shape index: {}]
  %s1 = inlined_call_operand.hbm [shape: bf16[128,512], index: 1, kind: input, shape index: {}]
  %s2 = inlined_call_operand.hbm [shape: f32[8,8,128], index: 2, kind: output, shape index: {}]
  %s3 = sld [smem:[#allocation0]]
  $region53: #{tpu_custom_call.1} parent=0
    _
  %s5 = ssub.s32 1, %s3
  %s6 = scalar_select 0, %s5, %s3
  $region1: #{tpu_custom_call.1} parent=0
    #allocation4 [shape = 'u8[65536]{0}', space=vmem, size = 0x10000, scoped, tag = 'input window, operand 0']
    #allocation5 [shape = 's32[2]{0}', space=sflag, size = 0x8, scoped, tag = 'scoped memory for tpu_custom_call.1']
    #allocation6 [shape = 's32[2]{0}', space=sflag, size = 0x8, scoped, tag = 'scoped memory for tpu_custom_call.1']
    #allocation7 [shape = 'u8[131072]{0}', space=vmem, size = 0x20000, scoped, tag = 'input window, operand 1, single buffered']
    #allocation8 [shape = 's32[1]{0}', space=sflag, size = 0x4, scoped, tag = 'scoped memory for tpu_custom_call.1']
    #allocation9 [shape = 'u8[32768]{0}', space=vmem, size = 0x8000, scoped, tag = 'output window, operand 0']
    %7 = vsyncpa [#allocation5], 0
    %s8 = scalar_lea.sflag [#allocation5], 1
    %9 = vsyncpa %s8, 0
    %10 = vsyncpa [#allocation8], 0
    %11 = vsyncpa [#allocation6], 0
    %s12 = scalar_lea.sflag [#allocation6], 1
    %13 = vsyncpa %s12, 0
    loop: start=0, step=1, limit=4
    $region2: #{tpu_custom_call.1} parent=1 // loop_pre_header
      _
    $region3: #{tpu_custom_call.1} parent=1 // loop_header
      %s15 = sphi 0, %s19
      %p16 = scmp.ge.s32.totalorder %s15, 4
      %s25 = sphi 0, %s27
      %s28 = sphi 0, %s25
      %s29 = sphi 0, %s28
      %s45 = sphi 0, %s29
      %s49 = sphi 0, %s49
      %s51 = sphi 0, %s49
      %s52 = sphi 0, %s51
      %s66 = sphi 0, %s52
      %s72 = sphi 0, %s74
      %s75 = sphi 0, %s72
      %s76 = sphi 0, %s75
      %s92 = sphi 0, %s76
    $region4: #{tpu_custom_call.1} parent=1 // loop_header_branch
      %18 = sbr.rel (%p16) target = $region8
    $region5: #{tpu_custom_call.1} parent=1 // loop_body
      %s20 = ssub.s32 %s15, 1
      %s21 = ssub.s32 %s15, 2
      %s22 = sadd.s32 %s15, 1
      %s23 = ssub.s32 %s15, %s22
      %p24 = scmp.eq.s32.totalorder %s23, 0
      %s26 = sadd.s32 %s25, 1
      %s27 = scalar_select %p24, %s25, %s26
      %p30 = pneg %p24
      %p31 = scmp.eq.s32.totalorder %s15, 1
      %p32 = por %p30, %p31
      %p33 = scmp.ne.s32.totalorder %s25, %s28
      %p34 = scmp.eq.s32.totalorder %s15, 0
      %p35 = por %p33, %p34
      %p36 = scmp.ne.s32.totalorder %s25, %s28
      %p37 = scmp.eq.s32.totalorder %s20, 1
      %p38 = por %p36, %p37
      %p39 = scmp.ne.s32.totalorder %s28, %s29
      %p40 = scmp.eq.s32.totalorder %s20, 0
      %p41 = por %p39, %p40
      %p42 = scmp.ne.s32.totalorder %s28, %s29
      %p43 = scmp.eq.s32.totalorder %s21, 1
      %p44 = por %p42, %p43
      %p46 = scmp.ne.s32.totalorder %s29, %s45
      %p47 = scmp.eq.s32.totalorder %s21, 0
      %p48 = por %p46, %p47
      %s50 = sadd.s32 %s49, 1
      %p53 = scmp.eq.s32.totalorder %s15, 1
      %p54 = scmp.ne.s32.totalorder %s49, %s51
      %p55 = scmp.eq.s32.totalorder %s15, 0
      %p56 = por %p54, %p55
      %p57 = scmp.ne.s32.totalorder %s49, %s51
      %p58 = scmp.eq.s32.totalorder %s20, 1
      %p59 = por %p57, %p58
      %p60 = scmp.ne.s32.totalorder %s51, %s52
      %p61 = scmp.eq.s32.totalorder %s20, 0
      %p62 = por %p60, %p61
      %p63 = scmp.ne.s32.totalorder %s51, %s52
      %p64 = scmp.eq.s32.totalorder %s21, 1
      %p65 = por %p63, %p64
      %p67 = scmp.ne.s32.totalorder %s52, %s66
      %p68 = scmp.eq.s32.totalorder %s21, 0
      %p69 = por %p67, %p68
      %s70 = ssub.s32 %s15, %s22
      %p71 = scmp.eq.s32.totalorder %s70, 0
      %s73 = sadd.s32 %s72, 1
      %s74 = scalar_select %p71, %s72, %s73
      %p77 = pneg %p71
      %p78 = scmp.eq.s32.totalorder %s15, 1
      %p79 = por %p77, %p78
      %p80 = scmp.ne.s32.totalorder %s72, %s75
      %p81 = scmp.eq.s32.totalorder %s15, 0
      %p82 = por %p80, %p81
      %p83 = scmp.ne.s32.totalorder %s72, %s75
      %p84 = scmp.eq.s32.totalorder %s20, 1
      %p85 = por %p83, %p84
      %p86 = scmp.ne.s32.totalorder %s75, %s76
      %p87 = scmp.eq.s32.totalorder %s20, 0
      %p88 = por %p86, %p87
      %p89 = scmp.ne.s32.totalorder %s75, %s76
      %p90 = scmp.eq.s32.totalorder %s21, 1
      %p91 = por %p89, %p90
      %p93 = scmp.ne.s32.totalorder %s76, %s92
      %p94 = scmp.eq.s32.totalorder %s21, 0
      %p95 = por %p93, %p94
      %p96 = scmp.le.s32.totalorder 1, %s15
      %p97 = scmp.lt.s32.totalorder %s15, 3
      %p98 = pnand %p96, %p97
      %p99 = pneg %p98
      // Predicated region
      $region9: #{tpu_custom_call.1} parent=5 // pred_check
        _
      $region10: #{tpu_custom_call.1} parent=5 // pred_check_branch
        %101 = sbr.rel (%p98) target = $region12
      $region11: #{tpu_custom_call.1} parent=5 // pred_region
        %s102 = ssub.s32 %s15, 1
        // Predicated region
        $region13: #{tpu_custom_call.1} parent=11 // pred_check
          %p103 = pneg %p62
        $region14: #{tpu_custom_call.1} parent=11 // pred_check_branch
          %105 = sbr.rel (%p103) target = $region16
        $region15: #{tpu_custom_call.1} parent=11 // pred_region
          %s107 = ssub.s32 4096, 4096
          %108 = vsyncadd [#allocation8], %s107
          %s109 = sshll.u32 [#allocation7], 4
          %s110 = int_to_ptr.vmem [resolvable:$true] %s109
          %115 = dma.hbm_to_vmem [thread:$0]  %s1, 4096, %s110, [#allocation8], 256, 256, 16
        $region16: #{tpu_custom_call.1} parent=11 // pred_fallthru
          _
      $region12: #{tpu_custom_call.1} parent=5 // pred_fallthru
        _
      %p116 = scmp.lt.s32.totalorder %s15, 2
      // Predicated region
      $region17: #{tpu_custom_call.1} parent=5 // pred_check
        %p117 = pneg %p116
      $region18: #{tpu_custom_call.1} parent=5 // pred_check_branch
        %119 = sbr.rel (%p117) target = $region20
      $region19: #{tpu_custom_call.1} parent=5 // pred_region
        // Predicated region
        $region21: #{tpu_custom_call.1} parent=19 // pred_check
          %p120 = pneg %p35
        $region22: #{tpu_custom_call.1} parent=19 // pred_check_branch
          %122 = sbr.rel (%p120) target = $region24
        $region23: #{tpu_custom_call.1} parent=19 // pred_region
          %s123 = sand.u32 %s25, 1
          %s124 = scalar_lea.sflag [#allocation5], %s123
          %s125 = sand.u32 %s25, 1
          %s126 = smul.addr %s125, 64
          %s127 = scalar_lea.vmem [#allocation4], %s126
          %s128 = smul.u32 4, %s15
          %s130 = ssub.s32 1024, 1024
          %131 = vsyncadd %s124, %s130
          %s132 = smul.addr %s128, 4
          %s133 = smul.addr %s132, 64
          %s134 = scalar_lea.hbm %s0, %s133
          %s135 = sshll.u32 %s127, 4
          %s136 = int_to_ptr.vmem [resolvable:$true] %s135
          %141 = dma.hbm_to_vmem [thread:$0]  %s134, 1024, %s136, %s124, 256, 256, 16
        $region24: #{tpu_custom_call.1} parent=19 // pred_fallthru
          _
      $region20: #{tpu_custom_call.1} parent=5 // pred_fallthru
        _
      %p142 = scmp.le.s32.totalorder 1, %s15
      %p143 = scmp.lt.s32.totalorder %s15, 3
      %p144 = pnand %p142, %p143
      %p145 = pneg %p144
      // Predicated region
      $region25: #{tpu_custom_call.1} parent=5 // pred_check
        _
      $region26: #{tpu_custom_call.1} parent=5 // pred_check_branch
        %147 = sbr.rel (%p144) target = $region28
      $region27: #{tpu_custom_call.1} parent=5 // pred_region
        %s148 = ssub.s32 %s15, 1
        %s149 = sand.u32 %s28, 1
        %s150 = scalar_lea.sflag [#allocation5], %s149
        %s151 = sand.u32 %s28, 1
        %s152 = smul.addr %s151, 64
        %s153 = scalar_lea.vmem [#allocation4], %s152
        // Predicated region
        $region29: #{tpu_custom_call.1} parent=27 // pred_check
          %p154 = pneg %p41
        $region30: #{tpu_custom_call.1} parent=27 // pred_check_branch
          %156 = sbr.rel (%p154) target = $region32
        $region31: #{tpu_custom_call.1} parent=27 // pred_region
          %157 = dma.done %s150, 1024
        $region32: #{tpu_custom_call.1} parent=27 // pred_fallthru
          _
        // Predicated region
        $region33: #{tpu_custom_call.1} parent=27 // pred_check
          %p158 = pneg %p62
        $region34: #{tpu_custom_call.1} parent=27 // pred_check_branch
          %160 = sbr.rel (%p158) target = $region36
        $region35: #{tpu_custom_call.1} parent=27 // pred_region
          %161 = dma.done [#allocation8], 4096
        $region36: #{tpu_custom_call.1} parent=27 // pred_fallthru
          _
        %s162 = sand.u32 %s28, 1
        %s163 = scalar_lea.sflag [#allocation5], %s162
        %s164 = sand.u32 %s28, 1
        %s165 = smul.addr %s164, 64
        %s166 = scalar_lea.vmem [#allocation4], %s165
        %p167 = pneg %p41
        %p168 = pneg %p38
        %p169 = pneg %p62
        %p170 = pneg %p59
        %p171 = pneg %p88
        %p172 = pneg %p85
        %s173 = sand.u32 %s75, 1
        %s174 = scalar_lea.sflag [#allocation6], %s173
        %s175 = sand.u32 %s75, 1
        %s176 = smul.addr %s175, 32
        %s177 = scalar_lea.vmem [#allocation9], %s176
        %s178 = smul.u32 4, %s20
        %s179 = smul.u32 4, %s20
        %p181 = scmp.eq.s32.totalorder %s20, 0
        // Predicated region
        $region37: #{tpu_custom_call.1} parent=27 // pred_check
          %p182 = pneg %p181
        $region38: #{tpu_custom_call.1} parent=27 // pred_check_branch
          %184 = sbr.rel (%p182) target = $region40
        $region39: #{tpu_custom_call.1} parent=27 // pred_region
          %185 = vst [vmem:[#allocation2] sm:$0xff] 0.0
          %186 = vst [vmem:[#allocation3] sm:$0xff] 0.0
        $region40: #{tpu_custom_call.1} parent=27 // pred_fallthru
          _
        %v187 = vld [vmem:[#allocation7] sm:$0xff]
        %v188 = vld [vmem:[#allocation7 + $0x8] sm:$0xff]
        %v189 = vld [vmem:[#allocation7 + $0x10] sm:$0xff]
        %v190 = vld [vmem:[#allocation7 + $0x18] sm:$0xff]
        %v191 = vld [vmem:[#allocation7 + $0x20] sm:$0xff]
        %v192 = vld [vmem:[#allocation7 + $0x28] sm:$0xff]
        %v193 = vld [vmem:[#allocation7 + $0x30] sm:$0xff]
        %v194 = vld [vmem:[#allocation7 + $0x38] sm:$0xff]
        %v195 = vld [vmem:[#allocation7 + $0x40] sm:$0xff]
        %v196 = vld [vmem:[#allocation7 + $0x48] sm:$0xff]
        %v197 = vld [vmem:[#allocation7 + $0x50] sm:$0xff]
        %v198 = vld [vmem:[#allocation7 + $0x58] sm:$0xff]
        %v199 = vld [vmem:[#allocation7 + $0x60] sm:$0xff]
        %v200 = vld [vmem:[#allocation7 + $0x68] sm:$0xff]
        %v201 = vld [vmem:[#allocation7 + $0x70] sm:$0xff]
        %v202 = vld [vmem:[#allocation7 + $0x78] sm:$0xff]
        %v203 = vld [vmem:[#allocation7 + $0x80] sm:$0xff]
        %v204 = vld [vmem:[#allocation7 + $0x88] sm:$0xff]
        %v205 = vld [vmem:[#allocation7 + $0x90] sm:$0xff]
        %v206 = vld [vmem:[#allocation7 + $0x98] sm:$0xff]
        %v207 = vld [vmem:[#allocation7 + $0xa0] sm:$0xff]
        %v208 = vld [vmem:[#allocation7 + $0xa8] sm:$0xff]
        %v209 = vld [vmem:[#allocation7 + $0xb0] sm:$0xff]
        %v210 = vld [vmem:[#allocation7 + $0xb8] sm:$0xff]
        %v211 = vld [vmem:[#allocation7 + $0xc0] sm:$0xff]
        %v212 = vld [vmem:[#allocation7 + $0xc8] sm:$0xff]
        %v213 = vld [vmem:[#allocation7 + $0xd0] sm:$0xff]
        %v214 = vld [vmem:[#allocation7 + $0xd8] sm:$0xff]
        %v215 = vld [vmem:[#allocation7 + $0xe0] sm:$0xff]
        %v216 = vld [vmem:[#allocation7 + $0xe8] sm:$0xff]
        %v217 = vld [vmem:[#allocation7 + $0xf0] sm:$0xff]
        %v218 = vld [vmem:[#allocation7 + $0xf8] sm:$0xff]
        %v219 = vld [vmem:[#allocation2] sm:$0xff]
        %v220 = vld [vmem:[#allocation3] sm:$0xff]
        %v221 = vld [vmem:[%s153] sm:$0xff]
        %v222 = vld [vmem:[%s153 + $0x8] sm:$0xff]
        %v223 = vunpack.c.l.bf16 %v221
        %v224 = vunpack.c.h.bf16 %v221
        %v225 = vunpack.c.l.bf16 %v222
        %v226 = vunpack.c.h.bf16 %v222
        %v227 = vpack.c.bf16 %v219, %v219
        %v260 = vunpack.c.l.b16 %v187
        %v261 = vunpack.c.h.b16 %v187
        %v262 = vunpack.c.l.b16 %v188
        %v263 = vunpack.c.h.b16 %v188
        %v264 = vunpack.c.l.b16 %v189
        %v265 = vunpack.c.h.b16 %v189
        %v266 = vunpack.c.l.b16 %v190
        %v267 = vunpack.c.h.b16 %v190
        %v268 = vunpack.c.l.b16 %v191
        %v269 = vunpack.c.h.b16 %v191
        %v270 = vunpack.c.l.b16 %v192
        %v271 = vunpack.c.h.b16 %v192
        %v272 = vunpack.c.l.b16 %v193
        %v273 = vunpack.c.h.b16 %v193
        %v274 = vunpack.c.l.b16 %v194
        %v275 = vunpack.c.h.b16 %v194
        %v276 = vunpack.c.l.b16 %v195
        %v277 = vunpack.c.h.b16 %v195
        %v278 = vunpack.c.l.b16 %v196
        %v279 = vunpack.c.h.b16 %v196
        %v280 = vunpack.c.l.b16 %v197
        %v281 = vunpack.c.h.b16 %v197
        %v282 = vunpack.c.l.b16 %v198
        %v283 = vunpack.c.h.b16 %v198
        %v284 = vunpack.c.l.b16 %v199
        %v285 = vunpack.c.h.b16 %v199
        %v286 = vunpack.c.l.b16 %v200
        %v287 = vunpack.c.h.b16 %v200
        %v288 = vunpack.c.l.b16 %v201
        %v289 = vunpack.c.h.b16 %v201
        %v290 = vunpack.c.l.b16 %v202
        %v291 = vunpack.c.h.b16 %v202
        %v292 = vunpack.c.l.b16 %v203
        %v293 = vunpack.c.h.b16 %v203
        %v294 = vunpack.c.l.b16 %v204
        %v295 = vunpack.c.h.b16 %v204
        %v296 = vunpack.c.l.b16 %v205
        %v297 = vunpack.c.h.b16 %v205
        %v298 = vunpack.c.l.b16 %v206
        %v299 = vunpack.c.h.b16 %v206
        %v300 = vunpack.c.l.b16 %v207
        %v301 = vunpack.c.h.b16 %v207
        %v302 = vunpack.c.l.b16 %v208
        %v303 = vunpack.c.h.b16 %v208
        %v304 = vunpack.c.l.b16 %v209
        %v305 = vunpack.c.h.b16 %v209
        %v306 = vunpack.c.l.b16 %v210
        %v307 = vunpack.c.h.b16 %v210
        %v308 = vunpack.c.l.b16 %v211
        %v309 = vunpack.c.h.b16 %v211
        %v310 = vunpack.c.l.b16 %v212
        %v311 = vunpack.c.h.b16 %v212
        %v312 = vunpack.c.l.b16 %v213
        %v313 = vunpack.c.h.b16 %v213
        %v314 = vunpack.c.l.b16 %v214
        %v315 = vunpack.c.h.b16 %v214
        %v316 = vunpack.c.l.b16 %v215
        %v317 = vunpack.c.h.b16 %v215
        %v318 = vunpack.c.l.b16 %v216
        %v319 = vunpack.c.h.b16 %v216
        %v320 = vunpack.c.l.b16 %v217
        %v321 = vunpack.c.h.b16 %v217
        %v322 = vunpack.c.l.b16 %v218
        %v323 = vunpack.c.h.b16 %v218
        %v324 = vpack.c.b16 %v264, %v260
        %v325 = vpack.c.b16 %v265, %v261
        %v326 = vpack.c.b16 %v266, %v262
        %v327 = vpack.c.b16 %v267, %v263
        %v328 = vpack.c.b16 %v272, %v268
        %v329 = vpack.c.b16 %v273, %v269
        %v330 = vpack.c.b16 %v274, %v270
        %v331 = vpack.c.b16 %v275, %v271
        %v332 = vpack.c.b16 %v280, %v276
        %v333 = vpack.c.b16 %v281, %v277
        %v334 = vpack.c.b16 %v282, %v278
        %v335 = vpack.c.b16 %v283, %v279
        %v336 = vpack.c.b16 %v288, %v284
        %v337 = vpack.c.b16 %v289, %v285
        %v338 = vpack.c.b16 %v290, %v286
        %v339 = vpack.c.b16 %v291, %v287
        %v340 = vpack.c.b16 %v296, %v292
        %v341 = vpack.c.b16 %v297, %v293
        %v342 = vpack.c.b16 %v298, %v294
        %v343 = vpack.c.b16 %v299, %v295
        %v344 = vpack.c.b16 %v304, %v300
        %v345 = vpack.c.b16 %v305, %v301
        %v346 = vpack.c.b16 %v306, %v302
        %v347 = vpack.c.b16 %v307, %v303
        %v348 = vpack.c.b16 %v312, %v308
        %v349 = vpack.c.b16 %v313, %v309
        %v350 = vpack.c.b16 %v314, %v310
        %v351 = vpack.c.b16 %v315, %v311
        %v352 = vpack.c.b16 %v320, %v316
        %v353 = vpack.c.b16 %v321, %v317
        %v354 = vpack.c.b16 %v322, %v318
        %v355 = vpack.c.b16 %v323, %v319
        %388 = vmatprep.subr.bf16.mxu0 %v325
        %389 = vmatpush1.bf16.msra.mxu0 %v324
        %390 = vmatprep.subr.bf16.mxu0 %v329
        %391 = vmatpush1.bf16.msra.mxu0 %v328
        %392 = vmatprep.subr.bf16.mxu0 %v333
        %393 = vmatpush1.bf16.msra.mxu0 %v332
        %394 = vmatprep.subr.bf16.mxu0 %v337
        %395 = vmatpush1.bf16.msra.mxu0 %v336
        %396 = vmatprep.subr.bf16.mxu0 %v341
        %397 = vmatpush1.bf16.msra.mxu0 %v340
        %398 = vmatprep.subr.bf16.mxu0 %v345
        %399 = vmatpush1.bf16.msra.mxu0 %v344
        %400 = vmatprep.subr.bf16.mxu0 %v349
        %401 = vmatpush1.bf16.msra.mxu0 %v348
        %402 = vmatprep.subr.bf16.mxu0 %v353
        %403 = vmatpush1.bf16.msra.mxu0 %v352
        %404 = vmatprep.subr.bf16.mxu0 0
        %405 = vmatpush1.bf16.msra.mxu0 0
        %406 = vmatprep.subr.bf16.mxu0 0
        %407 = vmatpush1.bf16.msra.mxu0 0
        %408 = vmatprep.subr.bf16.mxu0 0
        %409 = vmatpush1.bf16.msra.mxu0 0
        %410 = vmatprep.subr.bf16.mxu0 0
        %411 = vmatpush1.bf16.msra.mxu0 0
        %412 = vmatprep.subr.bf16.mxu0 0
        %413 = vmatpush1.bf16.msra.mxu0 0
        %414 = vmatprep.subr.bf16.mxu0 0
        %415 = vmatpush1.bf16.msra.mxu0 0
        %416 = vmatprep.subr.bf16.mxu0 0
        %417 = vmatpush1.bf16.msra.mxu0 0
        %418 = vmatprep.subr.bf16.mxu0 0
        %419 = vmatpush1.bf16.msra.mxu0 0
        %420 = vmatprep.mubr.bf16.mxu0 0
        %421 = vmatmul.mubr.bf16.gmra.mrb[0].mxu0 %v227
        %v422 = vpop.f32.mrb[0].mxu0
        %v423 = vadd.f32 0.0, %v422
        %v424 = vpop.f32.mrb[0].mxu0
        %v425 = vadd.f32 0.0, %v424
        %v426 = vpop.f32.mrb[0].mxu0
        %v427 = vpop.f32.mrb[0].mxu0
        %428 = vdwg.mxu0
        %429 = vmatprep.subr.bf16.mxu0 %v327
        %430 = vmatpush1.bf16.msra.mxu0 %v326
        %431 = vmatprep.subr.bf16.mxu0 %v331
        %432 = vmatpush1.bf16.msra.mxu0 %v330
        %433 = vmatprep.subr.bf16.mxu0 %v335
        %434 = vmatpush1.bf16.msra.mxu0 %v334
        %435 = vmatprep.subr.bf16.mxu0 %v339
        %436 = vmatpush1.bf16.msra.mxu0 %v338
        %437 = vmatprep.subr.bf16.mxu0 %v343
        %438 = vmatpush1.bf16.msra.mxu0 %v342
        %439 = vmatprep.subr.bf16.mxu0 %v347
        %440 = vmatpush1.bf16.msra.mxu0 %v346
        %441 = vmatprep.subr.bf16.mxu0 %v351
        %442 = vmatpush1.bf16.msra.mxu0 %v350
        %443 = vmatprep.subr.bf16.mxu0 %v355
        %444 = vmatpush1.bf16.msra.mxu0 %v354
        %445 = vmatprep.subr.bf16.mxu0 0
        %446 = vmatpush1.bf16.msra.mxu0 0
        %447 = vmatprep.subr.bf16.mxu0 0
        %448 = vmatpush1.bf16.msra.mxu0 0
        %449 = vmatprep.subr.bf16.mxu0 0
        %450 = vmatpush1.bf16.msra.mxu0 0
        %451 = vmatprep.subr.bf16.mxu0 0
        %452 = vmatpush1.bf16.msra.mxu0 0
        %453 = vmatprep.subr.bf16.mxu0 0
        %454 = vmatpush1.bf16.msra.mxu0 0
        %455 = vmatprep.subr.bf16.mxu0 0
        %456 = vmatpush1.bf16.msra.mxu0 0
        %457 = vmatprep.subr.bf16.mxu0 0
        %458 = vmatpush1.bf16.msra.mxu0 0
        %459 = vmatprep.subr.bf16.mxu0 0
        %460 = vmatpush1.bf16.msra.mxu0 0
        %461 = vmatprep.mubr.bf16.mxu0 0
        %462 = vmatmul.mubr.bf16.gmra.mrb[0].mxu0 %v227
        %v463 = vpop.f32.mrb[0].mxu0
        %v464 = vadd.f32 0.0, %v463
        %v465 = vpop.f32.mrb[0].mxu0
        %v466 = vadd.f32 0.0, %v465
        %v467 = vpop.f32.mrb[0].mxu0
        %v468 = vpop.f32.mrb[0].mxu0
        %469 = vdwg.mxu0
        %v470 = vadd.f32 %v223, %v423
        %v471 = vadd.f32 %v224, %v425
        %v472 = vadd.f32 %v225, %v464
        %v473 = vadd.f32 %v226, %v466
        %v474 = vxor.u32 %v470, 2147483648
        %v475 = vmul.f32 %v474, 1.442695
        %v476 = vpow.pop %v475
        %v477 = vadd.f32 %v476, 1.0
        %v478 = vrcp.pop %v477
        %v479 = vmul.f32 1.0, %v478
        %v480 = vxor.u32 %v471, 2147483648
        %v481 = vmul.f32 %v480, 1.442695
        %v482 = vpow.pop %v481
        %v483 = vadd.f32 %v482, 1.0
        %v484 = vrcp.pop %v483
        %v485 = vmul.f32 1.0, %v484
        %v486 = vtanh.pop %v472
        %v487 = vxor.u32 %v473, 2147483648
        %v488 = vmul.f32 %v487, 1.442695
        %v489 = vpow.pop %v488
        %v490 = vadd.f32 %v489, 1.0
        %v491 = vrcp.pop %v490
        %v492 = vmul.f32 1.0, %v491
        %v493 = vmul.f32 %v485, %v220
        %v494 = vmul.f32 %v479, %v486
        %v495 = vadd.f32 %v493, %v494
        %v496 = vtanh.pop %v495
        %v497 = vmul.f32 %v492, %v496
        %498 = vst [vmem:[%s177] sm:$0xff] %v497
        %s499 = scalar_lea.vmem %s153, 16 [#allocation4]
        %v500 = vld [vmem:[%s499] sm:$0xff]
        %v501 = vld [vmem:[%s499 + $0x8] sm:$0xff]
        %v502 = vunpack.c.l.bf16 %v500
        %v503 = vunpack.c.h.bf16 %v500
        %v504 = vunpack.c.l.bf16 %v501
        %v505 = vunpack.c.h.bf16 %v501
        %v506 = vpack.c.bf16 %v497, %v497
        %507 = vmatprep.subr.bf16.mxu0 %v325
        %508 = vmatpush1.bf16.msra.mxu0 %v324
        %509 = vmatprep.subr.bf16.mxu0 %v329
        %510 = vmatpush1.bf16.msra.mxu0 %v328
        %511 = vmatprep.subr.bf16.mxu0 %v333
        %512 = vmatpush1.bf16.msra.mxu0 %v332
        %513 = vmatprep.subr.bf16.mxu0 %v337
        %514 = vmatpush1.bf16.msra.mxu0 %v336
        %515 = vmatprep.subr.bf16.mxu0 %v341
        %516 = vmatpush1.bf16.msra.mxu0 %v340
        %517 = vmatprep.subr.bf16.mxu0 %v345
        %518 = vmatpush1.bf16.msra.mxu0 %v344
        %519 = vmatprep.subr.bf16.mxu0 %v349
        %520 = vmatpush1.bf16.msra.mxu0 %v348
        %521 = vmatprep.subr.bf16.mxu0 %v353
        %522 = vmatpush1.bf16.msra.mxu0 %v352
        %523 = vmatprep.subr.bf16.mxu0 0
        %524 = vmatpush1.bf16.msra.mxu0 0
        %525 = vmatprep.subr.bf16.mxu0 0
        %526 = vmatpush1.bf16.msra.mxu0 0
        %527 = vmatprep.subr.bf16.mxu0 0
        %528 = vmatpush1.bf16.msra.mxu0 0
        %529 = vmatprep.subr.bf16.mxu0 0
        %530 = vmatpush1.bf16.msra.mxu0 0
        %531 = vmatprep.subr.bf16.mxu0 0
        %532 = vmatpush1.bf16.msra.mxu0 0
        %533 = vmatprep.subr.bf16.mxu0 0
        %534 = vmatpush1.bf16.msra.mxu0 0
        %535 = vmatprep.subr.bf16.mxu0 0
        %536 = vmatpush1.bf16.msra.mxu0 0
        %537 = vmatprep.subr.bf16.mxu0 0
        %538 = vmatpush1.bf16.msra.mxu0 0
        %539 = vmatprep.mubr.bf16.mxu0 0
        %540 = vmatmul.mubr.bf16.gmra.mrb[0].mxu0 %v506
        %v541 = vpop.f32.mrb[0].mxu0
        %v542 = vadd.f32 0.0, %v541
        %v543 = vpop.f32.mrb[0].mxu0
        %v544 = vadd.f32 0.0, %v543
        %v545 = vpop.f32.mrb[0].mxu0
        %v546 = vpop.f32.mrb[0].mxu0
        %547 = vdwg.mxu0
        %548 = vmatprep.subr.bf16.mxu0 %v327
        %549 = vmatpush1.bf16.msra.mxu0 %v326
        %550 = vmatprep.subr.bf16.mxu0 %v331
        %551 = vmatpush1.bf16.msra.mxu0 %v330
        %552 = vmatprep.subr.bf16.mxu0 %v335
        %553 = vmatpush1.bf16.msra.mxu0 %v334
        %554 = vmatprep.subr.bf16.mxu0 %v339
        %555 = vmatpush1.bf16.msra.mxu0 %v338
        %556 = vmatprep.subr.bf16.mxu0 %v343
        %557 = vmatpush1.bf16.msra.mxu0 %v342
        %558 = vmatprep.subr.bf16.mxu0 %v347
        %559 = vmatpush1.bf16.msra.mxu0 %v346
        %560 = vmatprep.subr.bf16.mxu0 %v351
        %561 = vmatpush1.bf16.msra.mxu0 %v350
        %562 = vmatprep.subr.bf16.mxu0 %v355
        %563 = vmatpush1.bf16.msra.mxu0 %v354
        %564 = vmatprep.subr.bf16.mxu0 0
        %565 = vmatpush1.bf16.msra.mxu0 0
        %566 = vmatprep.subr.bf16.mxu0 0
        %567 = vmatpush1.bf16.msra.mxu0 0
        %568 = vmatprep.subr.bf16.mxu0 0
        %569 = vmatpush1.bf16.msra.mxu0 0
        %570 = vmatprep.subr.bf16.mxu0 0
        %571 = vmatpush1.bf16.msra.mxu0 0
        %572 = vmatprep.subr.bf16.mxu0 0
        %573 = vmatpush1.bf16.msra.mxu0 0
        %574 = vmatprep.subr.bf16.mxu0 0
        %575 = vmatpush1.bf16.msra.mxu0 0
        %576 = vmatprep.subr.bf16.mxu0 0
        %577 = vmatpush1.bf16.msra.mxu0 0
        %578 = vmatprep.subr.bf16.mxu0 0
        %579 = vmatpush1.bf16.msra.mxu0 0
        %580 = vmatprep.mubr.bf16.mxu0 0
        %581 = vmatmul.mubr.bf16.gmra.mrb[0].mxu0 %v506
        %v582 = vpop.f32.mrb[0].mxu0
        %v583 = vadd.f32 0.0, %v582
        %v584 = vpop.f32.mrb[0].mxu0
        %v585 = vadd.f32 0.0, %v584
        %v586 = vpop.f32.mrb[0].mxu0
        %v587 = vpop.f32.mrb[0].mxu0
        %588 = vdwg.mxu0
        %v589 = vadd.f32 %v502, %v542
        %v590 = vadd.f32 %v503, %v544
        %v591 = vadd.f32 %v504, %v583
        %v592 = vadd.f32 %v505, %v585
        %v593 = vxor.u32 %v589, 2147483648
        %v594 = vmul.f32 %v593, 1.442695
        %v595 = vpow.pop %v594
        %v596 = vadd.f32 %v595, 1.0
        %v597 = vrcp.pop %v596
        %v598 = vmul.f32 1.0, %v597
        %v599 = vxor.u32 %v590, 2147483648
        %v600 = vmul.f32 %v599, 1.442695
        %v601 = vpow.pop %v600
        %v602 = vadd.f32 %v601, 1.0
        %v603 = vrcp.pop %v602
        %v604 = vmul.f32 1.0, %v603
        %v605 = vtanh.pop %v591
        %v606 = vxor.u32 %v592, 2147483648
        %v607 = vmul.f32 %v606, 1.442695
        %v608 = vpow.pop %v607
        %v609 = vadd.f32 %v608, 1.0
        %v610 = vrcp.pop %v609
        %v611 = vmul.f32 1.0, %v610
        %v612 = vmul.f32 %v604, %v495
        %v613 = vmul.f32 %v598, %v605
        %v614 = vadd.f32 %v612, %v613
        %v615 = vtanh.pop %v614
        %v616 = vmul.f32 %v611, %v615
        %s617 = scalar_lea.vmem %s177, 8 [#allocation9]
        %618 = vst [vmem:[%s617] sm:$0xff] %v616
        %s619 = scalar_lea.vmem %s153, 32 [#allocation4]
        %v620 = vld [vmem:[%s619] sm:$0xff]
        %v621 = vld [vmem:[%s619 + $0x8] sm:$0xff]
        %v622 = vunpack.c.l.bf16 %v620
        %v623 = vunpack.c.h.bf16 %v620
        %v624 = vunpack.c.l.bf16 %v621
        %v625 = vunpack.c.h.bf16 %v621
        %v626 = vpack.c.bf16 %v616, %v616
        %627 = vmatprep.subr.bf16.mxu0 %v325
        %628 = vmatpush1.bf16.msra.mxu0 %v324
        %629 = vmatprep.subr.bf16.mxu0 %v329
        %630 = vmatpush1.bf16.msra.mxu0 %v328
        %631 = vmatprep.subr.bf16.mxu0 %v333
        %632 = vmatpush1.bf16.msra.mxu0 %v332
        %633 = vmatprep.subr.bf16.mxu0 %v337
        %634 = vmatpush1.bf16.msra.mxu0 %v336
        %635 = vmatprep.subr.bf16.mxu0 %v341
        %636 = vmatpush1.bf16.msra.mxu0 %v340
        %637 = vmatprep.subr.bf16.mxu0 %v345
        %638 = vmatpush1.bf16.msra.mxu0 %v344
        %639 = vmatprep.subr.bf16.mxu0 %v349
        %640 = vmatpush1.bf16.msra.mxu0 %v348
        %641 = vmatprep.subr.bf16.mxu0 %v353
        %642 = vmatpush1.bf16.msra.mxu0 %v352
        %643 = vmatprep.subr.bf16.mxu0 0
        %644 = vmatpush1.bf16.msra.mxu0 0
        %645 = vmatprep.subr.bf16.mxu0 0
        %646 = vmatpush1.bf16.msra.mxu0 0
        %647 = vmatprep.subr.bf16.mxu0 0
        %648 = vmatpush1.bf16.msra.mxu0 0
        %649 = vmatprep.subr.bf16.mxu0 0
        %650 = vmatpush1.bf16.msra.mxu0 0
        %651 = vmatprep.subr.bf16.mxu0 0
        %652 = vmatpush1.bf16.msra.mxu0 0
        %653 = vmatprep.subr.bf16.mxu0 0
        %654 = vmatpush1.bf16.msra.mxu0 0
        %655 = vmatprep.subr.bf16.mxu0 0
        %656 = vmatpush1.bf16.msra.mxu0 0
        %657 = vmatprep.subr.bf16.mxu0 0
        %658 = vmatpush1.bf16.msra.mxu0 0
        %659 = vmatprep.mubr.bf16.mxu0 0
        %660 = vmatmul.mubr.bf16.gmra.mrb[0].mxu0 %v626
        %v661 = vpop.f32.mrb[0].mxu0
        %v662 = vadd.f32 0.0, %v661
        %v663 = vpop.f32.mrb[0].mxu0
        %v664 = vadd.f32 0.0, %v663
        %v665 = vpop.f32.mrb[0].mxu0
        %v666 = vpop.f32.mrb[0].mxu0
        %667 = vdwg.mxu0
        %668 = vmatprep.subr.bf16.mxu0 %v327
        %669 = vmatpush1.bf16.msra.mxu0 %v326
        %670 = vmatprep.subr.bf16.mxu0 %v331
        %671 = vmatpush1.bf16.msra.mxu0 %v330
        %672 = vmatprep.subr.bf16.mxu0 %v335
        %673 = vmatpush1.bf16.msra.mxu0 %v334
        %674 = vmatprep.subr.bf16.mxu0 %v339
        %675 = vmatpush1.bf16.msra.mxu0 %v338
        %676 = vmatprep.subr.bf16.mxu0 %v343
        %677 = vmatpush1.bf16.msra.mxu0 %v342
        %678 = vmatprep.subr.bf16.mxu0 %v347
        %679 = vmatpush1.bf16.msra.mxu0 %v346
        %680 = vmatprep.subr.bf16.mxu0 %v351
        %681 = vmatpush1.bf16.msra.mxu0 %v350
        %682 = vmatprep.subr.bf16.mxu0 %v355
        %683 = vmatpush1.bf16.msra.mxu0 %v354
        %684 = vmatprep.subr.bf16.mxu0 0
        %685 = vmatpush1.bf16.msra.mxu0 0
        %686 = vmatprep.subr.bf16.mxu0 0
        %687 = vmatpush1.bf16.msra.mxu0 0
        %688 = vmatprep.subr.bf16.mxu0 0
        %689 = vmatpush1.bf16.msra.mxu0 0
        %690 = vmatprep.subr.bf16.mxu0 0
        %691 = vmatpush1.bf16.msra.mxu0 0
        %692 = vmatprep.subr.bf16.mxu0 0
        %693 = vmatpush1.bf16.msra.mxu0 0
        %694 = vmatprep.subr.bf16.mxu0 0
        %695 = vmatpush1.bf16.msra.mxu0 0
        %696 = vmatprep.subr.bf16.mxu0 0
        %697 = vmatpush1.bf16.msra.mxu0 0
        %698 = vmatprep.subr.bf16.mxu0 0
        %699 = vmatpush1.bf16.msra.mxu0 0
        %700 = vmatprep.mubr.bf16.mxu0 0
        %701 = vmatmul.mubr.bf16.gmra.mrb[0].mxu0 %v626
        %v702 = vpop.f32.mrb[0].mxu0
        %v703 = vadd.f32 0.0, %v702
        %v704 = vpop.f32.mrb[0].mxu0
        %v705 = vadd.f32 0.0, %v704
        %v706 = vpop.f32.mrb[0].mxu0
        %v707 = vpop.f32.mrb[0].mxu0
        %708 = vdwg.mxu0
        %v709 = vadd.f32 %v622, %v662
        %v710 = vadd.f32 %v623, %v664
        %v711 = vadd.f32 %v624, %v703
        %v712 = vadd.f32 %v625, %v705
        %v713 = vxor.u32 %v709, 2147483648
        %v714 = vmul.f32 %v713, 1.442695
        %v715 = vpow.pop %v714
        %v716 = vadd.f32 %v715, 1.0
        %v717 = vrcp.pop %v716
        %v718 = vmul.f32 1.0, %v717
        %v719 = vxor.u32 %v710, 2147483648
        %v720 = vmul.f32 %v719, 1.442695
        %v721 = vpow.pop %v720
        %v722 = vadd.f32 %v721, 1.0
        %v723 = vrcp.pop %v722
        %v724 = vmul.f32 1.0, %v723
        %v725 = vtanh.pop %v711
        %v726 = vxor.u32 %v712, 2147483648
        %v727 = vmul.f32 %v726, 1.442695
        %v728 = vpow.pop %v727
        %v729 = vadd.f32 %v728, 1.0
        %v730 = vrcp.pop %v729
        %v731 = vmul.f32 1.0, %v730
        %v732 = vmul.f32 %v724, %v614
        %v733 = vmul.f32 %v718, %v725
        %v734 = vadd.f32 %v732, %v733
        %v735 = vtanh.pop %v734
        %v736 = vmul.f32 %v731, %v735
        %s737 = scalar_lea.vmem %s177, 16 [#allocation9]
        %738 = vst [vmem:[%s737] sm:$0xff] %v736
        %s739 = scalar_lea.vmem %s153, 48 [#allocation4]
        %v740 = vld [vmem:[%s739] sm:$0xff]
        %v741 = vld [vmem:[%s739 + $0x8] sm:$0xff]
        %v742 = vunpack.c.l.bf16 %v740
        %v743 = vunpack.c.h.bf16 %v740
        %v744 = vunpack.c.l.bf16 %v741
        %v745 = vunpack.c.h.bf16 %v741
        %v746 = vpack.c.bf16 %v736, %v736
        %747 = vmatprep.subr.bf16.mxu0 %v325
        %748 = vmatpush1.bf16.msra.mxu0 %v324
        %749 = vmatprep.subr.bf16.mxu0 %v329
        %750 = vmatpush1.bf16.msra.mxu0 %v328
        %751 = vmatprep.subr.bf16.mxu0 %v333
        %752 = vmatpush1.bf16.msra.mxu0 %v332
        %753 = vmatprep.subr.bf16.mxu0 %v337
        %754 = vmatpush1.bf16.msra.mxu0 %v336
        %755 = vmatprep.subr.bf16.mxu0 %v341
        %756 = vmatpush1.bf16.msra.mxu0 %v340
        %757 = vmatprep.subr.bf16.mxu0 %v345
        %758 = vmatpush1.bf16.msra.mxu0 %v344
        %759 = vmatprep.subr.bf16.mxu0 %v349
        %760 = vmatpush1.bf16.msra.mxu0 %v348
        %761 = vmatprep.subr.bf16.mxu0 %v353
        %762 = vmatpush1.bf16.msra.mxu0 %v352
        %763 = vmatprep.subr.bf16.mxu0 0
        %764 = vmatpush1.bf16.msra.mxu0 0
        %765 = vmatprep.subr.bf16.mxu0 0
        %766 = vmatpush1.bf16.msra.mxu0 0
        %767 = vmatprep.subr.bf16.mxu0 0
        %768 = vmatpush1.bf16.msra.mxu0 0
        %769 = vmatprep.subr.bf16.mxu0 0
        %770 = vmatpush1.bf16.msra.mxu0 0
        %771 = vmatprep.subr.bf16.mxu0 0
        %772 = vmatpush1.bf16.msra.mxu0 0
        %773 = vmatprep.subr.bf16.mxu0 0
        %774 = vmatpush1.bf16.msra.mxu0 0
        %775 = vmatprep.subr.bf16.mxu0 0
        %776 = vmatpush1.bf16.msra.mxu0 0
        %777 = vmatprep.subr.bf16.mxu0 0
        %778 = vmatpush1.bf16.msra.mxu0 0
        %779 = vmatprep.mubr.bf16.mxu0 0
        %780 = vmatmul.mubr.bf16.gmra.mrb[0].mxu0 %v746
        %v781 = vpop.f32.mrb[0].mxu0
        %v782 = vadd.f32 0.0, %v781
        %v783 = vpop.f32.mrb[0].mxu0
        %v784 = vadd.f32 0.0, %v783
        %v785 = vpop.f32.mrb[0].mxu0
        %v786 = vpop.f32.mrb[0].mxu0
        %787 = vdwg.mxu0
        %788 = vmatprep.subr.bf16.mxu0 %v327
        %789 = vmatpush1.bf16.msra.mxu0 %v326
        %790 = vmatprep.subr.bf16.mxu0 %v331
        %791 = vmatpush1.bf16.msra.mxu0 %v330
        %792 = vmatprep.subr.bf16.mxu0 %v335
        %793 = vmatpush1.bf16.msra.mxu0 %v334
        %794 = vmatprep.subr.bf16.mxu0 %v339
        %795 = vmatpush1.bf16.msra.mxu0 %v338
        %796 = vmatprep.subr.bf16.mxu0 %v343
        %797 = vmatpush1.bf16.msra.mxu0 %v342
        %798 = vmatprep.subr.bf16.mxu0 %v347
        %799 = vmatpush1.bf16.msra.mxu0 %v346
        %800 = vmatprep.subr.bf16.mxu0 %v351
        %801 = vmatpush1.bf16.msra.mxu0 %v350
        %802 = vmatprep.subr.bf16.mxu0 %v355
        %803 = vmatpush1.bf16.msra.mxu0 %v354
        %804 = vmatprep.subr.bf16.mxu0 0
        %805 = vmatpush1.bf16.msra.mxu0 0
        %806 = vmatprep.subr.bf16.mxu0 0
        %807 = vmatpush1.bf16.msra.mxu0 0
        %808 = vmatprep.subr.bf16.mxu0 0
        %809 = vmatpush1.bf16.msra.mxu0 0
        %810 = vmatprep.subr.bf16.mxu0 0
        %811 = vmatpush1.bf16.msra.mxu0 0
        %812 = vmatprep.subr.bf16.mxu0 0
        %813 = vmatpush1.bf16.msra.mxu0 0
        %814 = vmatprep.subr.bf16.mxu0 0
        %815 = vmatpush1.bf16.msra.mxu0 0
        %816 = vmatprep.subr.bf16.mxu0 0
        %817 = vmatpush1.bf16.msra.mxu0 0
        %818 = vmatprep.subr.bf16.mxu0 0
        %819 = vmatpush1.bf16.msra.mxu0 0
        %820 = vmatprep.mubr.bf16.mxu0 0
        %821 = vmatmul.mubr.bf16.gmra.mrb[0].mxu0 %v746
        %v822 = vpop.f32.mrb[0].mxu0
        %v823 = vadd.f32 0.0, %v822
        %v824 = vpop.f32.mrb[0].mxu0
        %v825 = vadd.f32 0.0, %v824
        %v826 = vpop.f32.mrb[0].mxu0
        %v827 = vpop.f32.mrb[0].mxu0
        %828 = vdwg.mxu0
        %v829 = vadd.f32 %v742, %v782
        %v830 = vadd.f32 %v743, %v784
        %v831 = vadd.f32 %v744, %v823
        %v832 = vadd.f32 %v745, %v825
        %v833 = vxor.u32 %v829, 2147483648
        %v834 = vmul.f32 %v833, 1.442695
        %v835 = vpow.pop %v834
        %v836 = vadd.f32 %v835, 1.0
        %v837 = vrcp.pop %v836
        %v838 = vmul.f32 1.0, %v837
        %v839 = vxor.u32 %v830, 2147483648
        %v840 = vmul.f32 %v839, 1.442695
        %v841 = vpow.pop %v840
        %v842 = vadd.f32 %v841, 1.0
        %v843 = vrcp.pop %v842
        %v844 = vmul.f32 1.0, %v843
        %v845 = vtanh.pop %v831
        %v846 = vxor.u32 %v832, 2147483648
        %v847 = vmul.f32 %v846, 1.442695
        %v848 = vpow.pop %v847
        %v849 = vadd.f32 %v848, 1.0
        %v850 = vrcp.pop %v849
        %v851 = vmul.f32 1.0, %v850
        %v852 = vmul.f32 %v844, %v734
        %v853 = vmul.f32 %v838, %v845
        %v854 = vadd.f32 %v852, %v853
        %v855 = vtanh.pop %v854
        %v856 = vmul.f32 %v851, %v855
        %s857 = scalar_lea.vmem %s177, 24 [#allocation9]
        %858 = vst [vmem:[%s857] sm:$0xff] %v856
        %859 = vst [vmem:[#allocation2] sm:$0xff] %v856
        %860 = vst [vmem:[#allocation3] sm:$0xff] %v854
        %s861 = sand.u32 %s75, 1
        %s862 = scalar_lea.sflag [#allocation6], %s861
        %s863 = sand.u32 %s75, 1
        %s864 = smul.addr %s863, 32
        %s865 = scalar_lea.vmem [#allocation9], %s864
        // Predicated region
        $region41: #{tpu_custom_call.1} parent=27 // pred_check
          %p866 = pneg %p85
        $region42: #{tpu_custom_call.1} parent=27 // pred_check_branch
          %868 = sbr.rel (%p866) target = $region44
        $region43: #{tpu_custom_call.1} parent=27 // pred_region
          %s869 = smul.u32 4, %s20
          %s871 = ssub.s32 512, 512
          %872 = vsyncadd %s862, %s871
          %s873 = smul.addr %s869, 128
          %s874 = scalar_lea.hbm %s2, %s873
          %s875 = sshll.u32 %s865, 4
          %s876 = int_to_ptr.vmem [resolvable:$true] %s875
          %881 = dma.vmem_to_hbm [thread:$0]  %s876, 512, %s874, %s862, 128, 128, 8
        $region44: #{tpu_custom_call.1} parent=27 // pred_fallthru
          _
      $region28: #{tpu_custom_call.1} parent=5 // pred_fallthru
        _
      %p882 = scmp.le.s32.totalorder 2, %s15
      // Predicated region
      $region45: #{tpu_custom_call.1} parent=5 // pred_check
        %p883 = pneg %p882
      $region46: #{tpu_custom_call.1} parent=5 // pred_check_branch
        %885 = sbr.rel (%p883) target = $region48
      $region47: #{tpu_custom_call.1} parent=5 // pred_region
        %s886 = ssub.s32 %s15, 2
        // Predicated region
        $region49: #{tpu_custom_call.1} parent=47 // pred_check
          %p887 = pneg %p91
        $region50: #{tpu_custom_call.1} parent=47 // pred_check_branch
          %889 = sbr.rel (%p887) target = $region52
        $region51: #{tpu_custom_call.1} parent=47 // pred_region
          %s890 = sand.u32 %s76, 1
          %s891 = scalar_lea.sflag [#allocation6], %s890
          %s892 = sand.u32 %s76, 1
          %s893 = smul.addr %s892, 32
          %s894 = scalar_lea.vmem [#allocation9], %s893
          %895 = dma.done %s891, 512
        $region52: #{tpu_custom_call.1} parent=47 // pred_fallthru
          _
      $region48: #{tpu_custom_call.1} parent=5 // pred_fallthru
        _
    $region6: #{tpu_custom_call.1} parent=1 // loop_footer
      %s19 = sadd.s32 1, %s15
    $region7: #{tpu_custom_call.1} parent=1 // loop_footer_branch
      %14 = sbr.rel target = $region3
    $region8: #{tpu_custom_call.1} parent=1 // loop_exit
      _
    %896 = vsyncpa [#allocation5], 1
    %s897 = scalar_lea.sflag [#allocation5], 1
    %898 = vsyncpa %s897, 1
    %899 = vsyncpa [#allocation8], 1
    %900 = vsyncpa [#allocation6], 1
    %s901 = scalar_lea.sflag [#allocation6], 1
    %902 = vsyncpa %s901, 1

</llo_original>
